<compile_context>
chip_gen: v7x
topology: tpu7x:2x2x1
jax: 0.10.0
libtpu: 0.0.40
codegen_flags: <defaults>
</compile_context>

<pallas_src>
import jax
import jax.numpy as jnp
from jax.experimental import pallas as pl
from jax.experimental.pallas import tpu as pltpu


def actor_kernel(x_ref, w1_ref, b1_ref, wd_ref, c_ref, o_ref):
    x = x_ref[...]                                              # (TILE_B, D)

    # Linear 1 + ReLU (MXU matmul, f32 accumulate).
    h = jnp.dot(x, w1_ref[...], preferred_element_type=jnp.float32) + b1_ref[...]
    h = jnp.maximum(h, 0.0)                                     # (TILE_B, 64)

    # LayerNorm statistics over the last dim (torch: biased variance, eps=1e-5).
    mean = jnp.mean(h, axis=-1, keepdims=True)                  # (TILE_B, 1)
    diff = h - mean
    var = jnp.mean(diff * diff, axis=-1, keepdims=True)
    inv = jax.lax.rsqrt(var + 1e-5)

    # Folded LN-affine + Linear2 logit difference:
    #   d = l1 - l0 = inv * (h @ wd - mean * sum(wd)) + bd
    hd = jnp.dot(h, wd_ref[...], preferred_element_type=jnp.float32)   # (TILE_B, 1)
    swd = c_ref[:, 0:1]                                         # (1, 1) sum(wd)
    bd = c_ref[:, 1:2]                                          # (1, 1) bias diff
    d = inv * (hd - mean * swd) + bd

    # 2-class softmax via sigmoid of the logit difference (single EUP tanh):
    #   p1 = sigmoid(d) = 0.5*(1 + tanh(d/2)),  p0 = 1 - p1
    p1 = 0.5 * (1.0 + jnp.tanh(0.5 * d))
    p0 = 1.0 - p1

    # Direct column stores (masked vst into 1 of 2 lanes; vst slot has slack).
    o_ref[:, 0:1] = p0.astype(o_ref.dtype)
    o_ref[:, 1:2] = p1.astype(o_ref.dtype)


def _round_up(n, m):
    return ((n + m - 1) // m) * m


def _choose_tile(b8, tile_b):
    # b8 is the batch rounded up to a multiple of 8; tile_b is a multiple of 8.
    if b8 <= 1024:
        # Small batch: a single tile (splitting only adds per-step overhead).
        return b8
    if b8 <= 2 * tile_b:
        # Medium batch: split evenly into two tiles so both v7x TensorCores work.
        return _round_up((b8 + 1) // 2, 8)
    return tile_b


def actor_forward(x, w1, b1, gamma, beta, w2, b2, *, tile_b=4096):
    B, D = x.shape
    H = w1.shape[1]
    O = w2.shape[1]

    # Fold LayerNorm affine + Linear2 into a single logit-difference dot
    # (done once per call on tiny (64,)-sized params; negligible cost).
    w2d = (w2[:, 1] - w2[:, 0]).reshape(H, 1)                   # (64, 1)
    wd = gamma.reshape(H, 1) * w2d                              # (64, 1)
    b2f = b2.reshape(-1)
    bd = (b2f[1] - b2f[0]) + jnp.sum(beta.reshape(-1) * w2d.reshape(-1))
    consts = jnp.concatenate(
        [jnp.sum(wd).reshape(1), bd.reshape(1)]).reshape(1, 2).astype(jnp.float32)

    # Pad only to a multiple of 8 sublanes (and only when required); the grid
    # uses cdiv so a partial tail block is handled by masked output writeback.
    b8 = _round_up(B, 8)
    x_in = x if b8 == B else jnp.pad(x, ((0, b8 - B), (0, 0)))

    tb = _choose_tile(b8, _round_up(tile_b, 8))
    grid = pl.cdiv(b8, tb)

    cost = pl.CostEstimate(
        flops=2 * b8 * (D * H + H),
        transcendentals=2 * b8,                                 # rsqrt + tanh per row
        bytes_accessed=4 * (b8 * D + b8 * O + D * H + 2 * H + 2),
    )

    vmem = pltpu.MemorySpace.VMEM
    out = pl.pallas_call(
        actor_kernel,
        out_shape=jax.ShapeDtypeStruct((b8, O), jnp.float32),
        grid_spec=pltpu.PrefetchScalarGridSpec(
            num_scalar_prefetch=0,
            grid=(grid,),
            in_specs=[
                pl.BlockSpec((tb, D), lambda i: (i, 0), memory_space=vmem),  # x (tiled)
                pl.BlockSpec((D, H), lambda i: (0, 0), memory_space=vmem),   # w1 (resident)
                pl.BlockSpec((1, H), lambda i: (0, 0), memory_space=vmem),   # b1
                pl.BlockSpec((H, 1), lambda i: (0, 0), memory_space=vmem),   # wd (folded LN+W2)
                pl.BlockSpec((1, 2), lambda i: (0, 0), memory_space=vmem),   # [sum(wd), bd]
            ],
            out_specs=pl.BlockSpec((tb, O), lambda i: (i, 0), memory_space=vmem),
        ),
        compiler_params=pltpu.CompilerParams(
            dimension_semantics=("parallel",),      # v7x: batch tiles shard across 2 TCs
            vmem_limit_bytes=32 * 1024 * 1024,      # headroom for tb<=8192 on all gens
        ),
        cost_estimate=cost,
    )(x_in, w1, b1, wd, consts)

    return out if b8 == B else out[:B]


def actor_reference(x, w1, b1, gamma, beta, w2, b2):
    h = jnp.maximum(x @ w1 + b1, 0.0)
    mean = jnp.mean(h, axis=-1, keepdims=True)
    var = jnp.mean((h - mean) ** 2, axis=-1, keepdims=True)
    h = (h - mean) / jnp.sqrt(var + 1e-5) * gamma + beta
    logits = h @ w2 + b2
    return jax.nn.softmax(logits, axis=-1)


if __name__ == "__main__":
    key = jax.random.PRNGKey(0)
    state_dim, hidden, out_dim = 32, 64, 2

    k_x, k_w1, k_b1, k_w2, k_b2 = jax.random.split(key, 5)

    # Deterministic synthetic parameters (weights ~ N(0, 0.1) as in __init__;
    # biases small uniform; LayerNorm gamma=1, beta=0 per torch defaults).
    w1 = 0.1 * jax.random.normal(k_w1, (state_dim, hidden), dtype=jnp.float32)
    b1 = 0.05 * jax.random.uniform(k_b1, (1, hidden), dtype=jnp.float32)
    gamma = jnp.ones((1, hidden), dtype=jnp.float32)
    beta = jnp.zeros((1, hidden), dtype=jnp.float32)
    w2 = 0.1 * jax.random.normal(k_w2, (hidden, out_dim), dtype=jnp.float32)
    b2 = 0.05 * jax.random.uniform(k_b2, (1, out_dim), dtype=jnp.float32)

    # B=8: single tile; B=37: padded (non-multiple-of-8) tail path;
    # B=1050: two even tiles (v7x both-TC path) + sliced pad tail.
    for B in (8, 37, 1050):
        x = jax.random.normal(jax.random.fold_in(k_x, B), (B, state_dim), dtype=jnp.float32)
        out = jax.block_until_ready(actor_forward(x, w1, b1, gamma, beta, w2, b2))
        ref = actor_reference(x, w1, b1, gamma, beta, w2, b2)
        assert out.shape == (B, out_dim)
        assert jnp.allclose(out, ref, atol=1e-5, rtol=1e-5), f"mismatch vs reference (B={B})"
        assert jnp.allclose(jnp.sum(out, axis=-1), 1.0, atol=1e-5), "softmax rows must sum to 1"

    print("KERNEL_OK")
</pallas_src>

<mosaic_0001>
module attributes {stable_mosaic.version = 11 : i64} {
  func.func @actor_kernel(%arg0: i32, %arg1: memref<8x32xf32, #tpu.memory_space<vmem>>, %arg2: memref<32x64xf32, #tpu.memory_space<vmem>>, %arg3: memref<1x64xf32, #tpu.memory_space<vmem>>, %arg4: memref<64x1xf32, #tpu.memory_space<vmem>>, %arg5: memref<1x2xf32, #tpu.memory_space<vmem>>, %arg6: memref<8x2xf32, #tpu.memory_space<vmem>>) attributes {dimension_semantics = [#tpu.dimension_semantics<parallel>], iteration_bounds = array<i64: 1>, scalar_prefetch = 0 : i64, scratch_operands = 0 : i64, tpu.core_type = #tpu.core_type<tc>, window_params = [{transform_indices = @transform_0, window_bounds = array<i64: 8, 32>}, {pipeline_mode = #tpu.pipeline_mode<synchronous>, transform_indices = @transform_1, window_bounds = array<i64: 32, 64>}, {pipeline_mode = #tpu.pipeline_mode<synchronous>, transform_indices = @transform_2, window_bounds = array<i64: 1, 64>}, {pipeline_mode = #tpu.pipeline_mode<synchronous>, transform_indices = @transform_3, window_bounds = array<i64: 64, 1>}, {pipeline_mode = #tpu.pipeline_mode<synchronous>, transform_indices = @transform_4, window_bounds = array<i64: 1, 2>}, {transform_indices = @transform_5, window_bounds = array<i64: 8, 2>}]} {
    %c0 = arith.constant 0 : index
    %c0_0 = arith.constant 0 : index
    %0 = vector.load %arg1[%c0, %c0_0] : memref<8x32xf32, #tpu.memory_space<vmem>>, vector<8x32xf32>
    %c0_1 = arith.constant 0 : index
    %c0_2 = arith.constant 0 : index
    %1 = vector.load %arg2[%c0_1, %c0_2] : memref<32x64xf32, #tpu.memory_space<vmem>>, vector<32x64xf32>
    %cst = arith.constant dense<0.000000e+00> : vector<8x64xf32>
    %2 = tpu.matmul %0, %1, %cst {dimension_numbers = #tpu.dot_dimension_numbers<[1], [0], [0], [1], [0, 0, 1, 1], [], []>} : vector<8x32xf32>, vector<32x64xf32>, vector<8x64xf32> -> vector<8x64xf32>
    %c0_3 = arith.constant 0 : index
    %c0_4 = arith.constant 0 : index
    %3 = vector.load %arg3[%c0_3, %c0_4] : memref<1x64xf32, #tpu.memory_space<vmem>>, vector<1x64xf32>
    %4 = vector.broadcast %3 : vector<1x64xf32> to vector<8x64xf32>
    %5 = arith.addf %2, %4 : vector<8x64xf32>
    %cst_5 = arith.constant 0.000000e+00 : f32
    %6 = vector.broadcast %cst_5 : f32 to vector<8x64xf32>
    %7 = arith.maximumf %5, %6 : vector<8x64xf32>
    %cst_6 = arith.constant dense<0.000000e+00> : vector<8xf32>
    %8 = vector.multi_reduction <add>, %7, %cst_6 [1] : vector<8x64xf32> to vector<8xf32>
    %9 = vector.shape_cast %8 : vector<8xf32> to vector<8x1xf32>
    %cst_7 = arith.constant 6.400000e+01 : f32
    %10 = vector.broadcast %cst_7 : f32 to vector<8x1xf32>
    %11 = arith.divf %9, %10 : vector<8x1xf32>
    %12 = vector.broadcast %11 : vector<8x1xf32> to vector<8x64xf32>
    %13 = arith.subf %7, %12 : vector<8x64xf32>
    %14 = arith.mulf %13, %13 : vector<8x64xf32>
    %cst_8 = arith.constant dense<0.000000e+00> : vector<8xf32>
    %15 = vector.multi_reduction <add>, %14, %cst_8 [1] : vector<8x64xf32> to vector<8xf32>
    %16 = vector.shape_cast %15 : vector<8xf32> to vector<8x1xf32>
    %cst_9 = arith.constant 6.400000e+01 : f32
    %17 = vector.broadcast %cst_9 : f32 to vector<8x1xf32>
    %18 = arith.divf %16, %17 : vector<8x1xf32>
    %cst_10 = arith.constant 9.99999974E-6 : f32
    %19 = vector.broadcast %cst_10 : f32 to vector<8x1xf32>
    %20 = arith.addf %18, %19 : vector<8x1xf32>
    %21 = math.rsqrt %20 : vector<8x1xf32>
    %c0_11 = arith.constant 0 : index
    %c0_12 = arith.constant 0 : index
    %22 = vector.load %arg4[%c0_11, %c0_12] : memref<64x1xf32, #tpu.memory_space<vmem>>, vector<64x1xf32>
    %cst_13 = arith.constant dense<0.000000e+00> : vector<8x1xf32>
    %23 = tpu.matmul %7, %22, %cst_13 {dimension_numbers = #tpu.dot_dimension_numbers<[1], [0], [0], [1], [0, 0, 1, 1], [], []>} : vector<8x64xf32>, vector<64x1xf32>, vector<8x1xf32> -> vector<8x1xf32>
    %c0_14 = arith.constant 0 : index
    %c0_15 = arith.constant 0 : index
    %24 = vector.load %arg5[%c0_14, %c0_15] : memref<1x2xf32, #tpu.memory_space<vmem>>, vector<1x1xf32>
    %c0_16 = arith.constant 0 : index
    %c1 = arith.constant 1 : index
    %25 = vector.load %arg5[%c0_16, %c1] : memref<1x2xf32, #tpu.memory_space<vmem>>, vector<1x1xf32>
    %26 = vector.broadcast %24 : vector<1x1xf32> to vector<8x1xf32>
    %27 = arith.mulf %11, %26 : vector<8x1xf32>
    %28 = arith.subf %23, %27 : vector<8x1xf32>
    %29 = arith.mulf %21, %28 : vector<8x1xf32>
    %30 = vector.broadcast %25 : vector<1x1xf32> to vector<8x1xf32>
    %31 = arith.addf %29, %30 : vector<8x1xf32>
    %cst_17 = arith.constant 5.000000e-01 : f32
    %32 = vector.broadcast %cst_17 : f32 to vector<8x1xf32>
    %33 = arith.mulf %32, %31 : vector<8x1xf32>
    %34 = math.tanh %33 : vector<8x1xf32>
    %cst_18 = arith.constant 1.000000e+00 : f32
    %35 = vector.broadcast %cst_18 : f32 to vector<8x1xf32>
    %36 = arith.addf %35, %34 : vector<8x1xf32>
    %cst_19 = arith.constant 5.000000e-01 : f32
    %37 = vector.broadcast %cst_19 : f32 to vector<8x1xf32>
    %38 = arith.mulf %37, %36 : vector<8x1xf32>
    %cst_20 = arith.constant 1.000000e+00 : f32
    %39 = vector.broadcast %cst_20 : f32 to vector<8x1xf32>
    %40 = arith.subf %39, %38 : vector<8x1xf32>
    %c0_21 = arith.constant 0 : index
    %c0_22 = arith.constant 0 : index
    %41 = vector.load %arg6[%c0_21, %c0_22] : memref<8x2xf32, #tpu.memory_space<vmem>>, vector<8x1xf32>
    tpu.vector_store %arg6[%c0_21, %c0_22], %40 {strides = array<i32>} : memref<8x2xf32, #tpu.memory_space<vmem>>, vector<8x1xf32>,
    %c0_23 = arith.constant 0 : index
    %c1_24 = arith.constant 1 : index
    %42 = vector.load %arg6[%c0_23, %c1_24] : memref<8x2xf32, #tpu.memory_space<vmem>>, vector<8x1xf32>
    tpu.vector_store %arg6[%c0_23, %c1_24], %38 {strides = array<i32>} : memref<8x2xf32, #tpu.memory_space<vmem>>, vector<8x1xf32>,
    return
  }
  func.func @transform_0(%arg0: i32) -> (i32, i32) {
    %c0_i32 = arith.constant 0 : i32
    %c0_i32_0 = arith.constant 0 : i32
    return %arg0, %c0_i32 : i32, i32
  }
  func.func @transform_1(%arg0: i32) -> (i32, i32) {
    %c0_i32 = arith.constant 0 : i32
    %c0_i32_0 = arith.constant 0 : i32
    %c0_i32_1 = arith.constant 0 : i32
    return %c0_i32, %c0_i32_0 : i32, i32
  }
  func.func @transform_2(%arg0: i32) -> (i32, i32) {
    %c0_i32 = arith.constant 0 : i32
    %c0_i32_0 = arith.constant 0 : i32
    %c0_i32_1 = arith.constant 0 : i32
    return %c0_i32, %c0_i32_0 : i32, i32
  }
  func.func @transform_3(%arg0: i32) -> (i32, i32) {
    %c0_i32 = arith.constant 0 : i32
    %c0_i32_0 = arith.constant 0 : i32
    %c0_i32_1 = arith.constant 0 : i32
    return %c0_i32, %c0_i32_0 : i32, i32
  }
  func.func @transform_4(%arg0: i32) -> (i32, i32) {
    %c0_i32 = arith.constant 0 : i32
    %c0_i32_0 = arith.constant 0 : i32
    %c0_i32_1 = arith.constant 0 : i32
    return %c0_i32, %c0_i32_0 : i32, i32
  }
  func.func @transform_5(%arg0: i32) -> (i32, i32) {
    %c0_i32 = arith.constant 0 : i32
    %c0_i32_0 = arith.constant 0 : i32
    return %arg0, %c0_i32 : i32, i32
  }
}

</mosaic_0001>

<llo_original>
// kernel: tpu_custom_call.1
$region0: #{tpu_custom_call.1}
  #allocation0 [shape = 'u32[]', space=smem, size = 0x4, offset = 0x4, fixed_abs, tag = 'smem constant byte address 0x4 - core index']
  #allocation1 [shape = 'u32[144,128]{1,0:T(1,128)}', space=vmem, size = 0x12000, scoped, tag = 'internal scratch']
  %s0 = inlined_call_operand.vmem [shape: f32[8,32], index: 0, kind: input, shape index: {}]
  %s1 = inlined_call_operand.vmem [shape: f32[32,64], index: 1, kind: input, shape index: {}]
  %s2 = inlined_call_operand.vmem [shape: f32[1,64], index: 2, kind: input, shape index: {}]
  %s3 = inlined_call_operand.vmem [shape: f32[64,1], index: 3, kind: input, shape index: {}]
  %s4 = inlined_call_operand.vmem [shape: f32[1,2], index: 4, kind: input, shape index: {}]
  %s5 = inlined_call_operand.vmem [shape: f32[8,2], index: 5, kind: output, shape index: {}]
  %s6 = sld [smem:[#allocation0]]
  $region30: #{tpu_custom_call.1} parent=0
    _
  %s8 = ssub.s32 1, %s6
  %s9 = scalar_select 0, %s8, %s6
  // Predicated region
  $region2: #{tpu_custom_call.1} parent=0 // pred_check
    _
  $region3: #{tpu_custom_call.1} parent=0 // pred_check_branch
    %11 = sbr.rel (0) target = $region5
  $region4: #{tpu_custom_call.1} parent=0 // pred_region
    _
  $region5: #{tpu_custom_call.1} parent=0 // pred_fallthru
    _
  // Predicated region
  $region6: #{tpu_custom_call.1} parent=0 // pred_check
    _
  $region7: #{tpu_custom_call.1} parent=0 // pred_check_branch
    %13 = sbr.rel (0) target = $region9
  $region8: #{tpu_custom_call.1} parent=0 // pred_region
    _
  $region9: #{tpu_custom_call.1} parent=0 // pred_fallthru
    _
  // Predicated region
  $region10: #{tpu_custom_call.1} parent=0 // pred_check
    _
  $region11: #{tpu_custom_call.1} parent=0 // pred_check_branch
    %15 = sbr.rel (0) target = $region13
  $region12: #{tpu_custom_call.1} parent=0 // pred_region
    _
  $region13: #{tpu_custom_call.1} parent=0 // pred_fallthru
    _
  // Predicated region
  $region14: #{tpu_custom_call.1} parent=0 // pred_check
    _
  $region15: #{tpu_custom_call.1} parent=0 // pred_check_branch
    %17 = sbr.rel (0) target = $region17
  $region16: #{tpu_custom_call.1} parent=0 // pred_region
    _
  $region17: #{tpu_custom_call.1} parent=0 // pred_fallthru
    _
  // Predicated region
  $region18: #{tpu_custom_call.1} parent=0 // pred_check
    _
  $region19: #{tpu_custom_call.1} parent=0 // pred_check_branch
    %19 = sbr.rel (0) target = $region21
  $region20: #{tpu_custom_call.1} parent=0 // pred_region
    _
  $region21: #{tpu_custom_call.1} parent=0 // pred_fallthru
    _
  %v20 = vld [vmem:[%s0] sm:$0xff]
  %v21 = vld [vmem:[%s1] sm:$0xff]
  %v22 = vld [vmem:[%s1 + $0x8] sm:$0xff]
  %v23 = vld [vmem:[%s1 + $0x10] sm:$0xff]
  %v24 = vld [vmem:[%s1 + $0x18] sm:$0xff]
  %v25 = vld [vmem:[%s2] sm:$0x1]
  %v27 = vlaneseq
  %v28 = vshrl.u32 %v27, 7
  %v29 = vsub.s32 0, %v28
  %v30 = vrot.slane %v25, %v29
  %vm32 = vcmask 261120
  %v34 = vsel %vm32, %v20, 0
  %36 = vmatprep.subr.mxu0 0.0
  %37 = vmatpush1.msra.mxu0 %v21
  %38 = vmatprep.subr.mxu0 0.0
  %39 = vmatpush1.msra.mxu0 %v22
  %40 = vmatprep.subr.mxu0 0.0
  %41 = vmatpush1.msra.mxu0 %v23
  %42 = vmatprep.subr.mxu0 0.0
  %43 = vmatpush1.msra.mxu0 %v24
  %44 = vmatprep.subr.mxu0 0.0
  %45 = vmatpush1.msra.mxu0 0.0
  %46 = vmatprep.subr.mxu0 0.0
  %47 = vmatpush1.msra.mxu0 0.0
  %48 = vmatprep.subr.mxu0 0.0
  %49 = vmatpush1.msra.mxu0 0.0
  %50 = vmatprep.subr.mxu0 0.0
  %51 = vmatpush1.msra.mxu0 0.0
  %52 = vmatprep.subr.mxu0 0.0
  %53 = vmatpush1.msra.mxu0 0.0
  %54 = vmatprep.subr.mxu0 0.0
  %55 = vmatpush1.msra.mxu0 0.0
  %56 = vmatprep.subr.mxu0 0.0
  %57 = vmatpush1.msra.mxu0 0.0
  %58 = vmatprep.subr.mxu0 0.0
  %59 = vmatpush1.msra.mxu0 0.0
  %60 = vmatprep.subr.mxu0 0.0
  %61 = vmatpush1.msra.mxu0 0.0
  %62 = vmatprep.subr.mxu0 0.0
  %63 = vmatpush1.msra.mxu0 0.0
  %64 = vmatprep.subr.mxu0 0.0
  %65 = vmatpush1.msra.mxu0 0.0
  %66 = vmatprep.subr.mxu0 0.0
  %67 = vmatpush1.msra.mxu0 0.0
  %68 = vmatprep.subr.mxu0 0.0
  %69 = vmatpush1.msra.mxu0 0.0
  %70 = vmatprep.subr.mxu0 0.0
  %71 = vmatpush1.msra.mxu0 0.0
  %72 = vmatprep.subr.mxu0 0.0
  %73 = vmatpush1.msra.mxu0 0.0
  %74 = vmatprep.subr.mxu0 0.0
  %75 = vmatpush1.msra.mxu0 0.0
  %76 = vmatprep.subr.mxu0 0.0
  %77 = vmatpush1.msra.mxu0 0.0
  %78 = vmatprep.subr.mxu0 0.0
  %79 = vmatpush1.msra.mxu0 0.0
  %80 = vmatprep.subr.mxu0 0.0
  %81 = vmatpush1.msra.mxu0 0.0
  %82 = vmatprep.subr.mxu0 0.0
  %83 = vmatpush1.msra.mxu0 0.0
  %84 = vmatprep.subr.mxu0 0.0
  %85 = vmatpush1.msra.mxu0 0.0
  %86 = vmatprep.subr.mxu0 0.0
  %87 = vmatpush1.msra.mxu0 0.0
  %88 = vmatprep.subr.mxu0 0.0
  %89 = vmatpush1.msra.mxu0 0.0
  %90 = vmatprep.subr.mxu0 0.0
  %91 = vmatpush1.msra.mxu0 0.0
  %92 = vmatprep.subr.mxu0 0.0
  %93 = vmatpush1.msra.mxu0 0.0
  %94 = vmatprep.subr.mxu0 0.0
  %95 = vmatpush1.msra.mxu0 0.0
  %96 = vmatprep.subr.mxu0 0.0
  %97 = vmatpush1.msra.mxu0 0.0
  %98 = vmatprep.subr.mxu0 0.0
  %99 = vmatpush1.msra.mxu0 0.0
  %100 = vmatprep.mubr.f32.mxu0 0.0
  %101 = vmatmul.mubr.f32.gmra.mrb[0].mxu0 %v34
  %v102 = vpop.f32.mrb[0].mxu0
  %v103 = vadd.f32 %v30, %v102
  %v104 = vpop.f32.mrb[0].mxu0
  %105 = vdwg.mxu0
  %v106 = vmax.f32 %v103, 0.0
  %vm107 = vcmask 523264
  %v108 = vsel %vm107, %v106, 0.0
  %109 = vadd.xlane.f32.xlu0 %v108
  %v110 = vpop.xlane.xlu0 %109
  %v111 = vrcp.pop 64.0
  %v112 = vmul.f32 %v110, %v111
  %v113 = vsub.f32 %v106, %v112
  %v114 = vmul.f32 %v113, %v113
  %v115 = vsel %vm107, %v114, 0.0
  %116 = vadd.xlane.f32.xlu0 %v115
  %v117 = vpop.xlane.xlu0 %116
  %v118 = vmul.f32 %v117, %v111
  %v119 = vadd.f32 %v118, 1e-05
  %v120 = vrsqrt.pop %v119
  %v121 = vld [vmem:[%s3] sm:$0xff]
  %v122 = vld [vmem:[%s3 + $0x8] sm:$0xff]
  %v123 = vld [vmem:[%s3 + $0x10] sm:$0xff]
  %v124 = vld [vmem:[%s3 + $0x18] sm:$0xff]
  %v125 = vld [vmem:[%s3 + $0x20] sm:$0xff]
  %v126 = vld [vmem:[%s3 + $0x28] sm:$0xff]
  %v127 = vld [vmem:[%s3 + $0x30] sm:$0xff]
  %v128 = vld [vmem:[%s3 + $0x38] sm:$0xff]
  %v130 = vsel %vm107, %v106, 0
  %132 = vmatprep.subr.mxu0 0.0
  %133 = vmatpush1.msra.mxu0 %v121
  %134 = vmatprep.subr.mxu0 0.0
  %135 = vmatpush1.msra.mxu0 %v122
  %136 = vmatprep.subr.mxu0 0.0
  %137 = vmatpush1.msra.mxu0 %v123
  %138 = vmatprep.subr.mxu0 0.0
  %139 = vmatpush1.msra.mxu0 %v124
  %140 = vmatprep.subr.mxu0 0.0
  %141 = vmatpush1.msra.mxu0 %v125
  %142 = vmatprep.subr.mxu0 0.0
  %143 = vmatpush1.msra.mxu0 %v126
  %144 = vmatprep.subr.mxu0 0.0
  %145 = vmatpush1.msra.mxu0 %v127
  %146 = vmatprep.subr.mxu0 0.0
  %147 = vmatpush1.msra.mxu0 %v128
  %148 = vmatprep.subr.mxu0 0.0
  %149 = vmatpush1.msra.mxu0 0.0
  %150 = vmatprep.subr.mxu0 0.0
  %151 = vmatpush1.msra.mxu0 0.0
  %152 = vmatprep.subr.mxu0 0.0
  %153 = vmatpush1.msra.mxu0 0.0
  %154 = vmatprep.subr.mxu0 0.0
  %155 = vmatpush1.msra.mxu0 0.0
  %156 = vmatprep.subr.mxu0 0.0
  %157 = vmatpush1.msra.mxu0 0.0
  %158 = vmatprep.subr.mxu0 0.0
  %159 = vmatpush1.msra.mxu0 0.0
  %160 = vmatprep.subr.mxu0 0.0
  %161 = vmatpush1.msra.mxu0 0.0
  %162 = vmatprep.subr.mxu0 0.0
  %163 = vmatpush1.msra.mxu0 0.0
  %164 = vmatprep.subr.mxu0 0.0
  %165 = vmatpush1.msra.mxu0 0.0
  %166 = vmatprep.subr.mxu0 0.0
  %167 = vmatpush1.msra.mxu0 0.0
  %168 = vmatprep.subr.mxu0 0.0
  %169 = vmatpush1.msra.mxu0 0.0
  %170 = vmatprep.subr.mxu0 0.0
  %171 = vmatpush1.msra.mxu0 0.0
  %172 = vmatprep.subr.mxu0 0.0
  %173 = vmatpush1.msra.mxu0 0.0
  %174 = vmatprep.subr.mxu0 0.0
  %175 = vmatpush1.msra.mxu0 0.0
  %176 = vmatprep.subr.mxu0 0.0
  %177 = vmatpush1.msra.mxu0 0.0
  %178 = vmatprep.subr.mxu0 0.0
  %179 = vmatpush1.msra.mxu0 0.0
  %180 = vmatprep.subr.mxu0 0.0
  %181 = vmatpush1.msra.mxu0 0.0
  %182 = vmatprep.subr.mxu0 0.0
  %183 = vmatpush1.msra.mxu0 0.0
  %184 = vmatprep.subr.mxu0 0.0
  %185 = vmatpush1.msra.mxu0 0.0
  %186 = vmatprep.subr.mxu0 0.0
  %187 = vmatpush1.msra.mxu0 0.0
  %188 = vmatprep.subr.mxu0 0.0
  %189 = vmatpush1.msra.mxu0 0.0
  %190 = vmatprep.subr.mxu0 0.0
  %191 = vmatpush1.msra.mxu0 0.0
  %192 = vmatprep.subr.mxu0 0.0
  %193 = vmatpush1.msra.mxu0 0.0
  %194 = vmatprep.subr.mxu0 0.0
  %195 = vmatpush1.msra.mxu0 0.0
  %196 = vmatprep.mubr.f32.mxu0 0.0
  %197 = vmatmul.mubr.f32.gmra.mrb[0].mxu0 %v130
  %v198 = vpop.f32.mrb[0].mxu0
  %v199 = vadd.f32 0.0, %v198
  %v200 = vpop.f32.mrb[0].mxu0
  %201 = vdwg.mxu0
  %v202 = vld [vmem:[%s4] sm:$0x1]
  %v204 = vlaneseq
  %v205 = vshrl.u32 %v204, 7
  %v206 = vsub.s32 0, %v205
  %v207 = vrot.slane %v202, %v206
  %v209 = vmul.f32 %v112, %v207
  %v210 = vsub.f32 %v199, %v209
  %v211 = vmul.f32 %v120, %v210
  %212 = vrot.lane.b32.xlu0 %v207, 127
  %v213 = vpop.permute.xlu0 %212
  %v215 = vadd.f32 %v211, %v213
  %v216 = vmul.f32 %v215, 0.5
  %v217 = vtanh.pop %v216
  %v218 = vadd.f32 %v217, 1.0
  %v219 = vmul.f32 %v218, 0.5
  %v220 = vsub.f32 1.0, %v219
  %vm221 = vcmask 7168
  %222 = vst.msk [vmem:[%s5] sm:$0xff] %vm221, %v220
  %224 = vrot.lane.b32.xlu0 %v219, 1
  %v225 = vpop.permute.xlu0 %224
  %vm227 = vcmask 15368
  %228 = vst.msk [vmem:[%s5] sm:$0xff] %vm227, %v225
  // Predicated region
  $region22: #{tpu_custom_call.1} parent=0 // pred_check
    _
  $region23: #{tpu_custom_call.1} parent=0 // pred_check_branch
    %230 = sbr.rel (0) target = $region25
  $region24: #{tpu_custom_call.1} parent=0 // pred_region
    _
  $region25: #{tpu_custom_call.1} parent=0 // pred_fallthru
    _
  // Predicated region
  $region26: #{tpu_custom_call.1} parent=0 // pred_check
    _
  $region27: #{tpu_custom_call.1} parent=0 // pred_check_branch
    %232 = sbr.rel (0) target = $region29
  $region28: #{tpu_custom_call.1} parent=0 // pred_region
    _
  $region29: #{tpu_custom_call.1} parent=0 // pred_fallthru
    _

</llo_original>
